<compile_context>
chip_gen: v7x
topology: tpu7x:2x2x1
jax: 0.10.0
libtpu: 0.0.40
codegen_flags: <defaults>
</compile_context>

<pallas_src>
import jax
import jax.numpy as jnp
from jax.experimental import pallas as pl
from jax.experimental.pallas import tpu as pltpu

BN_EPS = 1e-5


def _round_up(n, m):
    return ((n + m - 1) // m) * m


def regression_fc_kernel(x_ref, w1_ref, b1_ref, w2_ref, b2_ref, w3_ref,
                         scal_ref, o_ref):
    a1 = scal_ref[0]          # PReLU slope 1
    a2 = scal_ref[1]          # PReLU slope 2
    b3 = scal_ref[2]          # folded final bias

    # ---- l1 (MXU, bf16 operands, f32 accumulation); x cast in-kernel ----
    x = x_ref[...].astype(jnp.bfloat16)
    q = jnp.dot(x, w1_ref[...], preferred_element_type=jnp.float32) + b1_ref[...]
    # ---- relu1 (PReLU, f32 VPU); drop1 = identity in eval; bn1 folded ----
    q = jnp.where(q > 0, q, a1 * q)

    # ---- l2 (MXU); bn1 already folded into w2/b2 ----
    q = jnp.dot(q.astype(jnp.bfloat16), w2_ref[...],
                preferred_element_type=jnp.float32) + b2_ref[...]
    # ---- relu2 (PReLU); drop2 = identity; bn2 folded into w3/b3 ----
    q = jnp.where(q > 0, q, a2 * q)

    # ---- l3: 256 -> 1 as VPU multiply + lane reduction (MXU stays free),
    #      then relayout the per-row column into a lane-dense (1, tile_n) row
    #      so the output store is unmasked full-lane vst (XLU work, hidden). --
    col = jnp.sum(q * w3_ref[...], axis=-1, keepdims=True) + b3   # (tile_n, 1)
    o_ref[...] = jnp.transpose(col, (1, 0)).astype(o_ref.dtype)   # (1, tile_n)


def _fold_batchnorms(p):
    """Fold eval-mode BN1 into (W2, b2) and BN2 into (W3, b3)."""
    s1 = p["g1"] * jax.lax.rsqrt(p["rv1"] + BN_EPS)       # (1, h1)
    t1 = p["bt1"] - p["rm1"] * s1                         # (1, h1)
    w2f = s1.reshape(-1, 1) * p["w2"]                     # (h1, h2)
    b2f = t1 @ p["w2"] + p["b2"]                          # (1, h2)

    s2 = p["g2"] * jax.lax.rsqrt(p["rv2"] + BN_EPS)       # (1, h2)
    t2 = p["bt2"] - p["rm2"] * s2                         # (1, h2)
    w3f = (s2.reshape(-1, 1) * p["w3"]).reshape(1, -1)    # (1, h2) row vector
    b3f = (t2 @ p["w3"] + p["b3"]).reshape(1, 1)          # (1, 1)
    return w2f, b2f, w3f, b3f


def prepare_params(p):
    """One-time host prep (hoisted out of the per-batch path): fold eval BNs
    into the following Linears, cast MXU operands to bf16, pack scalars."""
    w2f, b2f, w3f, b3f = _fold_batchnorms(p)
    scal = jnp.concatenate(
        [p["a1"].reshape(-1), p["a2"].reshape(-1), b3f.reshape(-1)]
    ).astype(jnp.float32)                                  # (3,) [a1, a2, b3']
    return dict(
        w1=p["w1"].astype(jnp.bfloat16),   # (in, h1)
        b1=p["b1"],                        # (1, h1) f32
        w2=w2f.astype(jnp.bfloat16),       # (h1, h2)  BN1 folded
        b2=b2f,                            # (1, h2) f32
        w3=w3f,                            # (1, h2) f32 row vector, BN2 folded
        scal=scal,
    )


def _choose_tile(n, tile_n_max):
    """Rows per grid step: multiple of 8, >= 2 grid steps whenever possible
    (v7x megacore), capped at tile_n_max."""
    if n <= 8:
        return n
    return min(tile_n_max, _round_up(pl.cdiv(n, 2), 8))


def regression_fc_net(x, prep, *, tile_n_max=2048):
    """x: (N, in_channel) float32 -> (N,) float32  (matches .squeeze())."""
    n, in_ch = x.shape
    h1 = prep["w1"].shape[1]
    h2 = prep["w2"].shape[1]

    tile_n = _choose_tile(n, tile_n_max)
    num_tiles = pl.cdiv(n, tile_n)

    # Deeper input prefetch only pays on longer grids; small batches keep the
    # default double buffer.
    x_spec_kwargs = {}
    if num_tiles >= 3:
        x_spec_kwargs["pipeline_mode"] = pl.Buffered(3)
    x_spec = pl.BlockSpec((tile_n, in_ch), lambda i: (i, 0), **x_spec_kwargs)

    def const(shape):   # weights/biases: resident in VMEM (constant block idx)
        return pl.BlockSpec(shape, lambda i: (0, 0))

    smem = pl.BlockSpec(memory_space=pltpu.MemorySpace.SMEM)

    n_alloc = num_tiles * tile_n
    flops = 2 * n_alloc * (in_ch * h1 + h1 * h2 + h2)
    bytes_accessed = (n_alloc * (in_ch + 1) * 4            # f32 x read + f32 out
                      + (in_ch * h1 + h1 * h2) * 2         # bf16 weights
                      + (h1 + 2 * h2 + 3) * 4)             # f32 biases/scalars

    out = pl.pallas_call(
        regression_fc_kernel,
        grid=(num_tiles,),
        out_shape=jax.ShapeDtypeStruct((num_tiles, 1, tile_n), jnp.float32),
        in_specs=[
            x_spec,                     # x tile, f32 (cast to bf16 in kernel)
            const((in_ch, h1)),         # w1 (bf16)
            const((1, h1)),             # b1 (f32)
            const((h1, h2)),            # w2' (bf16, BN1 folded)
            const((1, h2)),             # b2' (f32)
            const((1, h2)),             # w3' (f32 row vector, BN2 folded)
            smem,                       # [a1, a2, b3'] scalars in SMEM
        ],
        out_specs=pl.BlockSpec((None, 1, tile_n), lambda i: (i, 0, 0)),
        compiler_params=pltpu.CompilerParams(
            dimension_semantics=("parallel",),
            vmem_limit_bytes=40 * 1024 * 1024),
        cost_estimate=pl.CostEstimate(
            flops=flops, transcendentals=0, bytes_accessed=bytes_accessed),
    )(x, prep["w1"], prep["b1"], prep["w2"], prep["b2"], prep["w3"],
      prep["scal"])

    # lane-dense tiles -> (N,); matches PyTorch .squeeze() on (N, 1)
    return out.reshape(-1)[:n]


def init_params(key, in_channel=512, h1=256, h2=256):
    ks = jax.random.split(key, 12)
    f32 = jnp.float32

    def lin(k, fan_in, fan_out):
        kw, kb = jax.random.split(k)
        bound = 1.0 / jnp.sqrt(fan_in)
        # stored already transposed: (in, out)
        w = jax.random.uniform(kw, (fan_in, fan_out), f32, -bound, bound)
        b = jax.random.uniform(kb, (1, fan_out), f32, -bound, bound)
        return w, b

    w1, b1 = lin(ks[0], in_channel, h1)
    w2, b2 = lin(ks[1], h1, h2)
    w3, b3 = lin(ks[2], h2, 1)

    return dict(
        w1=w1, b1=b1,
        a1=jnp.full((1, 1), 0.25, f32),                      # PReLU default slope
        g1=jax.random.uniform(ks[3], (1, h1), f32, 0.5, 1.5),
        bt1=jax.random.uniform(ks[4], (1, h1), f32, -0.1, 0.1),
        rm1=jax.random.uniform(ks[5], (1, h1), f32, -0.5, 0.5),
        rv1=jax.random.uniform(ks[6], (1, h1), f32, 0.5, 1.5),
        w2=w2, b2=b2,
        a2=jnp.full((1, 1), 0.25, f32),
        g2=jax.random.uniform(ks[7], (1, h2), f32, 0.5, 1.5),
        bt2=jax.random.uniform(ks[8], (1, h2), f32, -0.1, 0.1),
        rm2=jax.random.uniform(ks[9], (1, h2), f32, -0.5, 0.5),
        rv2=jax.random.uniform(ks[10], (1, h2), f32, 0.5, 1.5),
        w3=w3, b3=b3,
    )


def reference_forward_f32(x, p):
    """Pure-f32 eval-mode reference matching the PyTorch module."""
    def prelu(q, a):
        return jnp.where(q > 0, q, a * q)

    def bn(q, g, bt, rm, rv):
        return (q - rm) * (g / jnp.sqrt(rv + BN_EPS)) + bt

    q = x @ p["w1"] + p["b1"]
    q = prelu(q, p["a1"][0, 0])
    q = bn(q, p["g1"], p["bt1"], p["rm1"], p["rv1"])
    q = q @ p["w2"] + p["b2"]
    q = prelu(q, p["a2"][0, 0])
    q = bn(q, p["g2"], p["bt2"], p["rm2"], p["rv2"])
    q = q @ p["w3"] + p["b3"]
    return q[:, 0]


def reference_forward_bf16(x, p):
    """Reference mirroring the kernel numerics (BN folded, bf16 MXU operands)."""
    w2f, b2f, w3f, b3f = _fold_batchnorms(p)
    bf16, f32 = jnp.bfloat16, jnp.float32

    q = jnp.dot(x.astype(bf16), p["w1"].astype(bf16),
                preferred_element_type=f32) + p["b1"]
    q = jnp.where(q > 0, q, p["a1"][0, 0] * q)
    q = jnp.dot(q.astype(bf16), w2f.astype(bf16),
                preferred_element_type=f32) + b2f
    q = jnp.where(q > 0, q, p["a2"][0, 0] * q)
    return jnp.sum(q * w3f, axis=-1) + b3f[0, 0]


if __name__ == "__main__":
    key = jax.random.PRNGKey(0)
    k_x, k_p = jax.random.split(key)

    # Small, deliberately ragged batch (exercises partial trailing block +
    # a 2-step grid).  in_channel=512 per the module default.
    batch, in_channel = 10, 512
    x = jax.random.normal(k_x, (batch, in_channel), jnp.float32)
    params = init_params(k_p, in_channel=in_channel)
    prep = prepare_params(params)          # one-time host prep, out of hot path

    out = jax.block_until_ready(regression_fc_net(x, prep))
    assert out.shape == (batch,), out.shape

    ref_bf16 = reference_forward_bf16(x, params)
    ref_f32 = reference_forward_f32(x, params)
    assert jnp.allclose(out, ref_bf16, atol=2e-3, rtol=2e-3), (out, ref_bf16)
    assert jnp.allclose(out, ref_f32, atol=6e-2, rtol=6e-2), (out, ref_f32)

    print("KERNEL_OK")
</pallas_src>

<mosaic_0001>
module attributes {stable_mosaic.version = 11 : i64} {
  func.func @regression_fc_kernel(%arg0: i32, %arg1: memref<8x512xf32, #tpu.memory_space<vmem>>, %arg2: memref<512x256xbf16, #tpu.memory_space<vmem>>, %arg3: memref<1x256xf32, #tpu.memory_space<vmem>>, %arg4: memref<256x256xbf16, #tpu.memory_space<vmem>>, %arg5: memref<1x256xf32, #tpu.memory_space<vmem>>, %arg6: memref<1x256xf32, #tpu.memory_space<vmem>>, %arg7: memref<3xf32, #tpu.memory_space<smem>>, %arg8: memref<1x1x8xf32, #tpu.memory_space<vmem>>) attributes {dimension_semantics = [#tpu.dimension_semantics<parallel>], iteration_bounds = array<i64: 2>, scalar_prefetch = 0 : i64, scratch_operands = 0 : i64, tpu.core_type = #tpu.core_type<tc>, window_params = [{transform_indices = @transform_0, window_bounds = array<i64: 8, 512>}, {pipeline_mode = #tpu.pipeline_mode<synchronous>, transform_indices = @transform_1, window_bounds = array<i64: 512, 256>}, {pipeline_mode = #tpu.pipeline_mode<synchronous>, transform_indices = @transform_2, window_bounds = array<i64: 1, 256>}, {pipeline_mode = #tpu.pipeline_mode<synchronous>, transform_indices = @transform_3, window_bounds = array<i64: 256, 256>}, {pipeline_mode = #tpu.pipeline_mode<synchronous>, transform_indices = @transform_4, window_bounds = array<i64: 1, 256>}, {pipeline_mode = #tpu.pipeline_mode<synchronous>, transform_indices = @transform_5, window_bounds = array<i64: 1, 256>}, {transform_indices = @transform_6, window_bounds = array<i64: 3>}, {transform_indices = @transform_7, window_bounds = array<i64: 1, 1, 8>}]} {
    %c0 = arith.constant 0 : index
    %0 = memref.load %arg7[%c0] : memref<3xf32, #tpu.memory_space<smem>>
    %c1 = arith.constant 1 : index
    %1 = memref.load %arg7[%c1] : memref<3xf32, #tpu.memory_space<smem>>
    %c2 = arith.constant 2 : index
    %2 = memref.load %arg7[%c2] : memref<3xf32, #tpu.memory_space<smem>>
    %c0_0 = arith.constant 0 : index
    %c0_1 = arith.constant 0 : index
    %3 = vector.load %arg1[%c0_0, %c0_1] : memref<8x512xf32, #tpu.memory_space<vmem>>, vector<8x512xf32>
    %4 = arith.truncf %3 : vector<8x512xf32> to vector<8x512xbf16>
    %c0_2 = arith.constant 0 : index
    %c0_3 = arith.constant 0 : index
    %5 = vector.load %arg2[%c0_2, %c0_3] : memref<512x256xbf16, #tpu.memory_space<vmem>>, vector<512x256xbf16>
    %cst = arith.constant dense<0.000000e+00> : vector<8x256xf32>
    %6 = tpu.matmul %4, %5, %cst {dimension_numbers = #tpu.dot_dimension_numbers<[1], [0], [0], [1], [0, 0, 1, 1], [], []>} : vector<8x512xbf16>, vector<512x256xbf16>, vector<8x256xf32> -> vector<8x256xf32>
    %c0_4 = arith.constant 0 : index
    %c0_5 = arith.constant 0 : index
    %7 = vector.load %arg3[%c0_4, %c0_5] : memref<1x256xf32, #tpu.memory_space<vmem>>, vector<1x256xf32>
    %8 = vector.broadcast %7 : vector<1x256xf32> to vector<8x256xf32>
    %9 = arith.addf %6, %8 : vector<8x256xf32>
    %cst_6 = arith.constant 0.000000e+00 : f32
    %10 = vector.broadcast %cst_6 : f32 to vector<8x256xf32>
    %11 = arith.cmpf ogt, %9, %10 : vector<8x256xf32>
    %12 = vector.broadcast %0 : f32 to vector<8x256xf32>
    %13 = arith.mulf %12, %9 : vector<8x256xf32>
    %14 = arith.select %11, %9, %13 : vector<8x256xi1>, vector<8x256xf32>
    %15 = arith.truncf %14 : vector<8x256xf32> to vector<8x256xbf16>
    %c0_7 = arith.constant 0 : index
    %c0_8 = arith.constant 0 : index
    %16 = vector.load %arg4[%c0_7, %c0_8] : memref<256x256xbf16, #tpu.memory_space<vmem>>, vector<256x256xbf16>
    %cst_9 = arith.constant dense<0.000000e+00> : vector<8x256xf32>
    %17 = tpu.matmul %15, %16, %cst_9 {dimension_numbers = #tpu.dot_dimension_numbers<[1], [0], [0], [1], [0, 0, 1, 1], [], []>} : vector<8x256xbf16>, vector<256x256xbf16>, vector<8x256xf32> -> vector<8x256xf32>
    %c0_10 = arith.constant 0 : index
    %c0_11 = arith.constant 0 : index
    %18 = vector.load %arg5[%c0_10, %c0_11] : memref<1x256xf32, #tpu.memory_space<vmem>>, vector<1x256xf32>
    %19 = vector.broadcast %18 : vector<1x256xf32> to vector<8x256xf32>
    %20 = arith.addf %17, %19 : vector<8x256xf32>
    %cst_12 = arith.constant 0.000000e+00 : f32
    %21 = vector.broadcast %cst_12 : f32 to vector<8x256xf32>
    %22 = arith.cmpf ogt, %20, %21 : vector<8x256xf32>
    %23 = vector.broadcast %1 : f32 to vector<8x256xf32>
    %24 = arith.mulf %23, %20 : vector<8x256xf32>
    %25 = arith.select %22, %20, %24 : vector<8x256xi1>, vector<8x256xf32>
    %c0_13 = arith.constant 0 : index
    %c0_14 = arith.constant 0 : index
    %26 = vector.load %arg6[%c0_13, %c0_14] : memref<1x256xf32, #tpu.memory_space<vmem>>, vector<1x256xf32>
    %27 = vector.broadcast %26 : vector<1x256xf32> to vector<8x256xf32>
    %28 = arith.mulf %25, %27 : vector<8x256xf32>
    %cst_15 = arith.constant dense<0.000000e+00> : vector<8xf32>
    %29 = vector.multi_reduction <add>, %28, %cst_15 [1] : vector<8x256xf32> to vector<8xf32>
    %30 = vector.shape_cast %29 : vector<8xf32> to vector<8x1xf32>
    %31 = vector.broadcast %2 : f32 to vector<8x1xf32>
    %32 = arith.addf %30, %31 : vector<8x1xf32>
    %33 = tpu.transpose %32, [1, 0] : vector<8x1xf32> -> vector<1x8xf32>
    %c0_16 = arith.constant 0 : index
    %c0_17 = arith.constant 0 : index
    %c0_18 = arith.constant 0 : index
    %34 = vector.load %arg8[%c0_16, %c0_17, %c0_18] : memref<1x1x8xf32, #tpu.memory_space<vmem>>, vector<1x1x8xf32>
    %35 = vector.shape_cast %34 : vector<1x1x8xf32> to vector<1x8xf32>
    %36 = vector.shape_cast %33 : vector<1x8xf32> to vector<1x1x8xf32>
    tpu.vector_store %arg8[%c0_16, %c0_17, %c0_18], %36 {strides = array<i32>} : memref<1x1x8xf32, #tpu.memory_space<vmem>>, vector<1x1x8xf32>,
    return
  }
  func.func @transform_0(%arg0: i32) -> (i32, i32) {
    %c0_i32 = arith.constant 0 : i32
    %c0_i32_0 = arith.constant 0 : i32
    return %arg0, %c0_i32 : i32, i32
  }
  func.func @transform_1(%arg0: i32) -> (i32, i32) {
    %c0_i32 = arith.constant 0 : i32
    %c0_i32_0 = arith.constant 0 : i32
    %c0_i32_1 = arith.constant 0 : i32
    return %c0_i32, %c0_i32_0 : i32, i32
  }
  func.func @transform_2(%arg0: i32) -> (i32, i32) {
    %c0_i32 = arith.constant 0 : i32
    %c0_i32_0 = arith.constant 0 : i32
    %c0_i32_1 = arith.constant 0 : i32
    return %c0_i32, %c0_i32_0 : i32, i32
  }
  func.func @transform_3(%arg0: i32) -> (i32, i32) {
    %c0_i32 = arith.constant 0 : i32
    %c0_i32_0 = arith.constant 0 : i32
    %c0_i32_1 = arith.constant 0 : i32
    return %c0_i32, %c0_i32_0 : i32, i32
  }
  func.func @transform_4(%arg0: i32) -> (i32, i32) {
    %c0_i32 = arith.constant 0 : i32
    %c0_i32_0 = arith.constant 0 : i32
    %c0_i32_1 = arith.constant 0 : i32
    return %c0_i32, %c0_i32_0 : i32, i32
  }
  func.func @transform_5(%arg0: i32) -> (i32, i32) {
    %c0_i32 = arith.constant 0 : i32
    %c0_i32_0 = arith.constant 0 : i32
    %c0_i32_1 = arith.constant 0 : i32
    return %c0_i32, %c0_i32_0 : i32, i32
  }
  func.func @transform_6(%arg0: i32) -> i32 {
    %c0_i32 = arith.constant 0 : i32
    %c0_i32_0 = arith.constant 0 : i32
    return %c0_i32 : i32
  }
  func.func @transform_7(%arg0: i32) -> (i32, i32, i32) {
    %c0_i32 = arith.constant 0 : i32
    %c0_i32_0 = arith.constant 0 : i32
    %c0_i32_1 = arith.constant 0 : i32
    return %arg0, %c0_i32, %c0_i32_0 : i32, i32, i32
  }
}

</mosaic_0001>

<llo_original>
// kernel: tpu_custom_call.1
$region0: #{tpu_custom_call.1}
  #allocation0 [shape = 'u32[]', space=smem, size = 0x4, offset = 0x4, fixed_abs, tag = 'smem constant byte address 0x4 - core index']
  #allocation1 [shape = 'u32[144,128]{1,0:T(1,128)}', space=vmem, size = 0x12000, scoped, tag = 'internal scratch']
  %s0 = inlined_call_operand.hbm [shape: f32[10,512], index: 0, kind: input, shape index: {}]
  %s1 = inlined_call_operand.hbm [shape: bf16[512,256], index: 1, kind: input, shape index: {}]
  %s2 = inlined_call_operand.vmem [shape: f32[1,256], index: 2, kind: input, shape index: {}]
  %s3 = inlined_call_operand.hbm [shape: bf16[256,256], index: 3, kind: input, shape index: {}]
  %s4 = inlined_call_operand.vmem [shape: f32[1,256], index: 4, kind: input, shape index: {}]
  %s5 = inlined_call_operand.vmem [shape: f32[1,256], index: 5, kind: input, shape index: {}]
  %s6 = inlined_call_operand.vmem [shape: f32[3], index: 6, kind: input, shape index: {}]
  %s7 = inlined_call_operand.hbm [shape: f32[2,1,8], index: 7, kind: output, shape index: {}]
  %s8 = sld [smem:[#allocation0]]
  $region77: #{tpu_custom_call.1} parent=0
    _
  %s10 = ssub.s32 1, %s8
  %s11 = scalar_select 0, %s10, %s8
  $region1: #{tpu_custom_call.1} parent=0
    #allocation2 [shape = 'u8[32768]{0}', space=vmem, size = 0x8000, scoped, tag = 'input window, operand 0']
    #allocation3 [shape = 's32[2]{0}', space=sflag, size = 0x8, scoped, tag = 'scoped memory for tpu_custom_call.1']
    #allocation4 [shape = 's32[2]{0}', space=sflag, size = 0x8, scoped, tag = 'scoped memory for tpu_custom_call.1']
    #allocation5 [shape = 's32[2]{0}', space=sflag, size = 0x8, scoped, tag = 'scoped memory for tpu_custom_call.1']
    #allocation6 [shape = 'u8[262144]{0}', space=vmem, size = 0x40000, scoped, tag = 'input window, operand 1, single buffered']
    #allocation7 [shape = 's32[1]{0}', space=sflag, size = 0x4, scoped, tag = 'scoped memory for tpu_custom_call.1']
    #allocation8 [shape = 'u8[131072]{0}', space=vmem, size = 0x20000, scoped, tag = 'input window, operand 3, single buffered']
    #allocation9 [shape = 'u8[512]{0}', space=smem, size = 0x200, scoped, tag = 'input window, operand 6, single buffered']
    #allocation10 [shape = 'u8[1024]{0}', space=vmem, size = 0x400, scoped, tag = 'output window, operand 0']
    %12 = vsyncpa [#allocation3], 0
    %s13 = scalar_lea.sflag [#allocation3], 1
    %14 = vsyncpa %s13, 0
    %15 = vsyncpa [#allocation7], 0
    %16 = vsyncpa [#allocation5], 0
    %17 = vsyncpa [#allocation4], 0
    %s18 = scalar_lea.sflag [#allocation4], 1
    %19 = vsyncpa %s18, 0
    loop: start=0, step=1, limit=4
    $region2: #{tpu_custom_call.1} parent=1 // loop_pre_header
      _
    $region3: #{tpu_custom_call.1} parent=1 // loop_header
      %s21 = sphi 0, %s25
      %p22 = scmp.ge.s32.totalorder %s21, 4
      %s31 = sphi 0, %s33
      %s34 = sphi 0, %s31
      %s35 = sphi 0, %s34
      %s51 = sphi 0, %s35
      %s55 = sphi 0, %s55
      %s57 = sphi 0, %s55
      %s58 = sphi 0, %s57
      %s72 = sphi 0, %s58
      %s76 = sphi 0, %s76
      %s78 = sphi 0, %s76
      %s79 = sphi 0, %s78
      %s93 = sphi 0, %s79
      %s97 = sphi 0, %s97
      %s99 = sphi 0, %s97
      %s100 = sphi 0, %s99
      %s114 = sphi 0, %s100
      %s118 = sphi 0, %s118
      %s120 = sphi 0, %s118
      %s121 = sphi 0, %s120
      %s135 = sphi 0, %s121
      %s139 = sphi 0, %s139
      %s141 = sphi 0, %s139
      %s142 = sphi 0, %s141
      %s156 = sphi 0, %s142
      %s160 = sphi 0, %s160
      %s162 = sphi 0, %s160
      %s163 = sphi 0, %s162
      %s177 = sphi 0, %s163
      %s183 = sphi 0, %s185
      %s186 = sphi 0, %s183
      %s187 = sphi 0, %s186
      %s203 = sphi 0, %s187
    $region4: #{tpu_custom_call.1} parent=1 // loop_header_branch
      %24 = sbr.rel (%p22) target = $region8
    $region5: #{tpu_custom_call.1} parent=1 // loop_body
      %s26 = ssub.s32 %s21, 1
      %s27 = ssub.s32 %s21, 2
      %s28 = sadd.s32 %s21, 1
      %s29 = ssub.s32 %s21, %s28
      %p30 = scmp.eq.s32.totalorder %s29, 0
      %s32 = sadd.s32 %s31, 1
      %s33 = scalar_select %p30, %s31, %s32
      %p36 = pneg %p30
      %p37 = scmp.eq.s32.totalorder %s21, 1
      %p38 = por %p36, %p37
      %p39 = scmp.ne.s32.totalorder %s31, %s34
      %p40 = scmp.eq.s32.totalorder %s21, 0
      %p41 = por %p39, %p40
      %p42 = scmp.ne.s32.totalorder %s31, %s34
      %p43 = scmp.eq.s32.totalorder %s26, 1
      %p44 = por %p42, %p43
      %p45 = scmp.ne.s32.totalorder %s34, %s35
      %p46 = scmp.eq.s32.totalorder %s26, 0
      %p47 = por %p45, %p46
      %p48 = scmp.ne.s32.totalorder %s34, %s35
      %p49 = scmp.eq.s32.totalorder %s27, 1
      %p50 = por %p48, %p49
      %p52 = scmp.ne.s32.totalorder %s35, %s51
      %p53 = scmp.eq.s32.totalorder %s27, 0
      %p54 = por %p52, %p53
      %s56 = sadd.s32 %s55, 1
      %p59 = scmp.eq.s32.totalorder %s21, 1
      %p60 = scmp.ne.s32.totalorder %s55, %s57
      %p61 = scmp.eq.s32.totalorder %s21, 0
      %p62 = por %p60, %p61
      %p63 = scmp.ne.s32.totalorder %s55, %s57
      %p64 = scmp.eq.s32.totalorder %s26, 1
      %p65 = por %p63, %p64
      %p66 = scmp.ne.s32.totalorder %s57, %s58
      %p67 = scmp.eq.s32.totalorder %s26, 0
      %p68 = por %p66, %p67
      %p69 = scmp.ne.s32.totalorder %s57, %s58
      %p70 = scmp.eq.s32.totalorder %s27, 1
      %p71 = por %p69, %p70
      %p73 = scmp.ne.s32.totalorder %s58, %s72
      %p74 = scmp.eq.s32.totalorder %s27, 0
      %p75 = por %p73, %p74
      %s77 = sadd.s32 %s76, 1
      %p80 = scmp.eq.s32.totalorder %s21, 1
      %p81 = scmp.ne.s32.totalorder %s76, %s78
      %p82 = scmp.eq.s32.totalorder %s21, 0
      %p83 = por %p81, %p82
      %p84 = scmp.ne.s32.totalorder %s76, %s78
      %p85 = scmp.eq.s32.totalorder %s26, 1
      %p86 = por %p84, %p85
      %p87 = scmp.ne.s32.totalorder %s78, %s79
      %p88 = scmp.eq.s32.totalorder %s26, 0
      %p89 = por %p87, %p88
      %p90 = scmp.ne.s32.totalorder %s78, %s79
      %p91 = scmp.eq.s32.totalorder %s27, 1
      %p92 = por %p90, %p91
      %p94 = scmp.ne.s32.totalorder %s79, %s93
      %p95 = scmp.eq.s32.totalorder %s27, 0
      %p96 = por %p94, %p95
      %s98 = sadd.s32 %s97, 1
      %p101 = scmp.eq.s32.totalorder %s21, 1
      %p102 = scmp.ne.s32.totalorder %s97, %s99
      %p103 = scmp.eq.s32.totalorder %s21, 0
      %p104 = por %p102, %p103
      %p105 = scmp.ne.s32.totalorder %s97, %s99
      %p106 = scmp.eq.s32.totalorder %s26, 1
      %p107 = por %p105, %p106
      %p108 = scmp.ne.s32.totalorder %s99, %s100
      %p109 = scmp.eq.s32.totalorder %s26, 0
      %p110 = por %p108, %p109
      %p111 = scmp.ne.s32.totalorder %s99, %s100
      %p112 = scmp.eq.s32.totalorder %s27, 1
      %p113 = por %p111, %p112
      %p115 = scmp.ne.s32.totalorder %s100, %s114
      %p116 = scmp.eq.s32.totalorder %s27, 0
      %p117 = por %p115, %p116
      %s119 = sadd.s32 %s118, 1
      %p122 = scmp.eq.s32.totalorder %s21, 1
      %p123 = scmp.ne.s32.totalorder %s118, %s120
      %p124 = scmp.eq.s32.totalorder %s21, 0
      %p125 = por %p123, %p124
      %p126 = scmp.ne.s32.totalorder %s118, %s120
      %p127 = scmp.eq.s32.totalorder %s26, 1
      %p128 = por %p126, %p127
      %p129 = scmp.ne.s32.totalorder %s120, %s121
      %p130 = scmp.eq.s32.totalorder %s26, 0
      %p131 = por %p129, %p130
      %p132 = scmp.ne.s32.totalorder %s120, %s121
      %p133 = scmp.eq.s32.totalorder %s27, 1
      %p134 = por %p132, %p133
      %p136 = scmp.ne.s32.totalorder %s121, %s135
      %p137 = scmp.eq.s32.totalorder %s27, 0
      %p138 = por %p136, %p137
      %s140 = sadd.s32 %s139, 1
      %p143 = scmp.eq.s32.totalorder %s21, 1
      %p144 = scmp.ne.s32.totalorder %s139, %s141
      %p145 = scmp.eq.s32.totalorder %s21, 0
      %p146 = por %p144, %p145
      %p147 = scmp.ne.s32.totalorder %s139, %s141
      %p148 = scmp.eq.s32.totalorder %s26, 1
      %p149 = por %p147, %p148
      %p150 = scmp.ne.s32.totalorder %s141, %s142
      %p151 = scmp.eq.s32.totalorder %s26, 0
      %p152 = por %p150, %p151
      %p153 = scmp.ne.s32.totalorder %s141, %s142
      %p154 = scmp.eq.s32.totalorder %s27, 1
      %p155 = por %p153, %p154
      %p157 = scmp.ne.s32.totalorder %s142, %s156
      %p158 = scmp.eq.s32.totalorder %s27, 0
      %p159 = por %p157, %p158
      %s161 = sadd.s32 %s160, 1
      %p164 = scmp.eq.s32.totalorder %s21, 1
      %p165 = scmp.ne.s32.totalorder %s160, %s162
      %p166 = scmp.eq.s32.totalorder %s21, 0
      %p167 = por %p165, %p166
      %p168 = scmp.ne.s32.totalorder %s160, %s162
      %p169 = scmp.eq.s32.totalorder %s26, 1
      %p170 = por %p168, %p169
      %p171 = scmp.ne.s32.totalorder %s162, %s163
      %p172 = scmp.eq.s32.totalorder %s26, 0
      %p173 = por %p171, %p172
      %p174 = scmp.ne.s32.totalorder %s162, %s163
      %p175 = scmp.eq.s32.totalorder %s27, 1
      %p176 = por %p174, %p175
      %p178 = scmp.ne.s32.totalorder %s163, %s177
      %p179 = scmp.eq.s32.totalorder %s27, 0
      %p180 = por %p178, %p179
      %s181 = ssub.s32 %s21, %s28
      %p182 = scmp.eq.s32.totalorder %s181, 0
      %s184 = sadd.s32 %s183, 1
      %s185 = scalar_select %p182, %s183, %s184
      %p188 = pneg %p182
      %p189 = scmp.eq.s32.totalorder %s21, 1
      %p190 = por %p188, %p189
      %p191 = scmp.ne.s32.totalorder %s183, %s186
      %p192 = scmp.eq.s32.totalorder %s21, 0
      %p193 = por %p191, %p192
      %p194 = scmp.ne.s32.totalorder %s183, %s186
      %p195 = scmp.eq.s32.totalorder %s26, 1
      %p196 = por %p194, %p195
      %p197 = scmp.ne.s32.totalorder %s186, %s187
      %p198 = scmp.eq.s32.totalorder %s26, 0
      %p199 = por %p197, %p198
      %p200 = scmp.ne.s32.totalorder %s186, %s187
      %p201 = scmp.eq.s32.totalorder %s27, 1
      %p202 = por %p200, %p201
      %p204 = scmp.ne.s32.totalorder %s187, %s203
      %p205 = scmp.eq.s32.totalorder %s27, 0
      %p206 = por %p204, %p205
      %p207 = scmp.le.s32.totalorder 1, %s21
      %p208 = scmp.lt.s32.totalorder %s21, 3
      %p209 = pnand %p207, %p208
      %p210 = pneg %p209
      // Predicated region
      $region9: #{tpu_custom_call.1} parent=5 // pred_check
        _
      $region10: #{tpu_custom_call.1} parent=5 // pred_check_branch
        %212 = sbr.rel (%p209) target = $region12
      $region11: #{tpu_custom_call.1} parent=5 // pred_region
        %s213 = ssub.s32 %s21, 1
        // Predicated region
        $region13: #{tpu_custom_call.1} parent=11 // pred_check
          %p214 = pneg %p68
        $region14: #{tpu_custom_call.1} parent=11 // pred_check_branch
          %216 = sbr.rel (%p214) target = $region16
        $region15: #{tpu_custom_call.1} parent=11 // pred_region
          %s218 = ssub.s32 8192, 8192
          %219 = vsyncadd [#allocation7], %s218
          %s220 = sshll.u32 [#allocation6], 4
          %s221 = int_to_ptr.vmem [resolvable:$true] %s220
          %226 = dma.hbm_to_vmem [thread:$0]  %s1, 8192, %s221, [#allocation7], 128, 128, 8
        $region16: #{tpu_custom_call.1} parent=11 // pred_fallthru
          _
        // Predicated region
        $region17: #{tpu_custom_call.1} parent=11 // pred_check
          %p227 = pneg %p89
        $region18: #{tpu_custom_call.1} parent=11 // pred_check_branch
          %229 = sbr.rel (%p227) target = $region20
        $region19: #{tpu_custom_call.1} parent=11 // pred_region
          _
        $region20: #{tpu_custom_call.1} parent=11 // pred_fallthru
          _
        // Predicated region
        $region21: #{tpu_custom_call.1} parent=11 // pred_check
          %p230 = pneg %p110
        $region22: #{tpu_custom_call.1} parent=11 // pred_check_branch
          %232 = sbr.rel (%p230) target = $region24
        $region23: #{tpu_custom_call.1} parent=11 // pred_region
          %s234 = ssub.s32 4096, 4096
          %235 = vsyncadd [#allocation7], %s234
          %s236 = sshll.u32 [#allocation8], 4
          %s237 = int_to_ptr.vmem [resolvable:$true] %s236
          %242 = dma.hbm_to_vmem [thread:$0]  %s3, 4096, %s237, [#allocation7], 128, 128, 8
        $region24: #{tpu_custom_call.1} parent=11 // pred_fallthru
          _
        // Predicated region
        $region25: #{tpu_custom_call.1} parent=11 // pred_check
          %p243 = pneg %p131
        $region26: #{tpu_custom_call.1} parent=11 // pred_check_branch
          %245 = sbr.rel (%p243) target = $region28
        $region27: #{tpu_custom_call.1} parent=11 // pred_region
          _
        $region28: #{tpu_custom_call.1} parent=11 // pred_fallthru
          _
        // Predicated region
        $region29: #{tpu_custom_call.1} parent=11 // pred_check
          %p246 = pneg %p152
        $region30: #{tpu_custom_call.1} parent=11 // pred_check_branch
          %248 = sbr.rel (%p246) target = $region32
        $region31: #{tpu_custom_call.1} parent=11 // pred_region
          _
        $region32: #{tpu_custom_call.1} parent=11 // pred_fallthru
          _
        // Predicated region
        $region33: #{tpu_custom_call.1} parent=11 // pred_check
          %p249 = pneg %p173
        $region34: #{tpu_custom_call.1} parent=11 // pred_check_branch
          %251 = sbr.rel (%p249) target = $region36
        $region35: #{tpu_custom_call.1} parent=11 // pred_region
          %s253 = ssub.s32 16, 16
          %254 = vsyncadd [#allocation5], %s253
          %s256 = sshll.u32 %s6, 4
          %s257 = int_to_ptr.vmem [resolvable:$true] %s256
          %259 = dma.vmem_to_smem %s257, 16, [#allocation9], [#allocation5]
        $region36: #{tpu_custom_call.1} parent=11 // pred_fallthru
          _
      $region12: #{tpu_custom_call.1} parent=5 // pred_fallthru
        _
      %p260 = scmp.lt.s32.totalorder %s21, 2
      // Predicated region
      $region37: #{tpu_custom_call.1} parent=5 // pred_check
        %p261 = pneg %p260
      $region38: #{tpu_custom_call.1} parent=5 // pred_check_branch
        %263 = sbr.rel (%p261) target = $region40
      $region39: #{tpu_custom_call.1} parent=5 // pred_region
        // Predicated region
        $region41: #{tpu_custom_call.1} parent=39 // pred_check
          %p264 = pneg %p41
        $region42: #{tpu_custom_call.1} parent=39 // pred_check_branch
          %266 = sbr.rel (%p264) target = $region44
        $region43: #{tpu_custom_call.1} parent=39 // pred_region
          %s267 = sand.u32 %s31, 1
          %s268 = scalar_lea.sflag [#allocation3], %s267
          %s269 = sand.u32 %s31, 1
          %s270 = smul.addr %s269, 32
          %s271 = scalar_lea.vmem [#allocation2], %s270
          %s273 = ssub.s32 512, 512
          %274 = vsyncadd %s268, %s273
          %s275 = smul.addr %s21, 4
          %s276 = smul.addr %s275, 128
          %s277 = scalar_lea.hbm %s0, %s276
          %s279 = sshll.u32 %s271, 4
          %s280 = int_to_ptr.vmem [resolvable:$true] %s279
          %282 = dma.hbm_to_vmem [thread:$0]  %s277, 512, %s280, %s268
        $region44: #{tpu_custom_call.1} parent=39 // pred_fallthru
          _
      $region40: #{tpu_custom_call.1} parent=5 // pred_fallthru
        _
      %p283 = scmp.le.s32.totalorder 1, %s21
      %p284 = scmp.lt.s32.totalorder %s21, 3
      %p285 = pnand %p283, %p284
      %p286 = pneg %p285
      // Predicated region
      $region45: #{tpu_custom_call.1} parent=5 // pred_check
        _
      $region46: #{tpu_custom_call.1} parent=5 // pred_check_branch
        %288 = sbr.rel (%p285) target = $region48
      $region47: #{tpu_custom_call.1} parent=5 // pred_region
        %s289 = ssub.s32 %s21, 1
        %s290 = sand.u32 %s34, 1
        %s291 = scalar_lea.sflag [#allocation3], %s290
        %s292 = sand.u32 %s34, 1
        %s293 = smul.addr %s292, 32
        %s294 = scalar_lea.vmem [#allocation2], %s293
        // Predicated region
        $region49: #{tpu_custom_call.1} parent=47 // pred_check
          %p295 = pneg %p47
        $region50: #{tpu_custom_call.1} parent=47 // pred_check_branch
          %297 = sbr.rel (%p295) target = $region52
        $region51: #{tpu_custom_call.1} parent=47 // pred_region
          %298 = dma.done %s291, 512
        $region52: #{tpu_custom_call.1} parent=47 // pred_fallthru
          _
        // Predicated region
        $region53: #{tpu_custom_call.1} parent=47 // pred_check
          %p299 = pneg %p68
        $region54: #{tpu_custom_call.1} parent=47 // pred_check_branch
          %301 = sbr.rel (%p299) target = $region56
        $region55: #{tpu_custom_call.1} parent=47 // pred_region
          %302 = dma.done [#allocation7], 8192
        $region56: #{tpu_custom_call.1} parent=47 // pred_fallthru
          _
        // Predicated region
        $region57: #{tpu_custom_call.1} parent=47 // pred_check
          %p303 = pneg %p110
        $region58: #{tpu_custom_call.1} parent=47 // pred_check_branch
          %305 = sbr.rel (%p303) target = $region60
        $region59: #{tpu_custom_call.1} parent=47 // pred_region
          %306 = dma.done [#allocation7], 4096
        $region60: #{tpu_custom_call.1} parent=47 // pred_fallthru
          _
        // Predicated region
        $region61: #{tpu_custom_call.1} parent=47 // pred_check
          %p307 = pneg %p173
        $region62: #{tpu_custom_call.1} parent=47 // pred_check_branch
          %309 = sbr.rel (%p307) target = $region64
        $region63: #{tpu_custom_call.1} parent=47 // pred_region
          %310 = dma.done [#allocation5], 16
        $region64: #{tpu_custom_call.1} parent=47 // pred_fallthru
          _
        %311 = sfence
        %s312 = sand.u32 %s34, 1
        %s313 = scalar_lea.sflag [#allocation3], %s312
        %s314 = sand.u32 %s34, 1
        %s315 = smul.addr %s314, 32
        %s316 = scalar_lea.vmem [#allocation2], %s315
        %p317 = pneg %p47
        %p318 = pneg %p44
        %p319 = pneg %p68
        %p320 = pneg %p65
        %p321 = pneg %p89
        %p322 = pneg %p86
        %p323 = pneg %p110
        %p324 = pneg %p107
        %p325 = pneg %p131
        %p326 = pneg %p128
        %p327 = pneg %p152
        %p328 = pneg %p149
        %p329 = pneg %p173
        %p330 = pneg %p170
        %p331 = pneg %p199
        %p332 = pneg %p196
        %s333 = sand.u32 %s186, 1
        %s334 = scalar_lea.sflag [#allocation4], %s333
        %s335 = sand.u32 %s186, 1
        %s336 = scalar_lea.vmem [#allocation10], %s335
        %s337 = sld [smem:[#allocation9]]
        %s338 = sld [smem:[#allocation9 + $0x1]]
        %s339 = sld [smem:[#allocation9 + $0x2]]
        %v340 = vld [vmem:[%s294] sm:$0xff]
        %v341 = vld [vmem:[%s294 + $0x8] sm:$0xff]
        %v342 = vld [vmem:[%s294 + $0x10] sm:$0xff]
        %v343 = vld [vmem:[%s294 + $0x18] sm:$0xff]
        %v344 = vpack.c.bf16 %v340, %v340
        %v345 = vpack.c.bf16 %v341, %v341
        %v346 = vpack.c.bf16 %v342, %v342
        %v347 = vpack.c.bf16 %v343, %v343
        %v348 = vld [vmem:[#allocation6] sm:$0xff]
        %v349 = vld [vmem:[#allocation6 + $0x8] sm:$0xff]
        %v350 = vld [vmem:[#allocation6 + $0x10] sm:$0xff]
        %v351 = vld [vmem:[#allocation6 + $0x18] sm:$0xff]
        %v352 = vld [vmem:[#allocation6 + $0x20] sm:$0xff]
        %v353 = vld [vmem:[#allocation6 + $0x28] sm:$0xff]
        %v354 = vld [vmem:[#allocation6 + $0x30] sm:$0xff]
        %v355 = vld [vmem:[#allocation6 + $0x38] sm:$0xff]
        %v356 = vld [vmem:[#allocation6 + $0x40] sm:$0xff]
        %v357 = vld [vmem:[#allocation6 + $0x48] sm:$0xff]
        %v358 = vld [vmem:[#allocation6 + $0x50] sm:$0xff]
        %v359 = vld [vmem:[#allocation6 + $0x58] sm:$0xff]
        %v360 = vld [vmem:[#allocation6 + $0x60] sm:$0xff]
        %v361 = vld [vmem:[#allocation6 + $0x68] sm:$0xff]
        %v362 = vld [vmem:[#allocation6 + $0x70] sm:$0xff]
        %v363 = vld [vmem:[#allocation6 + $0x78] sm:$0xff]
        %v364 = vld [vmem:[#allocation6 + $0x80] sm:$0xff]
        %v365 = vld [vmem:[#allocation6 + $0x88] sm:$0xff]
        %v366 = vld [vmem:[#allocation6 + $0x90] sm:$0xff]
        %v367 = vld [vmem:[#allocation6 + $0x98] sm:$0xff]
        %v368 = vld [vmem:[#allocation6 + $0xa0] sm:$0xff]
        %v369 = vld [vmem:[#allocation6 + $0xa8] sm:$0xff]
        %v370 = vld [vmem:[#allocation6 + $0xb0] sm:$0xff]
        %v371 = vld [vmem:[#allocation6 + $0xb8] sm:$0xff]
        %v372 = vld [vmem:[#allocation6 + $0xc0] sm:$0xff]
        %v373 = vld [vmem:[#allocation6 + $0xc8] sm:$0xff]
        %v374 = vld [vmem:[#allocation6 + $0xd0] sm:$0xff]
        %v375 = vld [vmem:[#allocation6 + $0xd8] sm:$0xff]
        %v376 = vld [vmem:[#allocation6 + $0xe0] sm:$0xff]
        %v377 = vld [vmem:[#allocation6 + $0xe8] sm:$0xff]
        %v378 = vld [vmem:[#allocation6 + $0xf0] sm:$0xff]
        %v379 = vld [vmem:[#allocation6 + $0xf8] sm:$0xff]
        %v380 = vld [vmem:[#allocation6 + $0x100] sm:$0xff]
        %v381 = vld [vmem:[#allocation6 + $0x108] sm:$0xff]
        %v382 = vld [vmem:[#allocation6 + $0x110] sm:$0xff]
        %v383 = vld [vmem:[#allocation6 + $0x118] sm:$0xff]
        %v384 = vld [vmem:[#allocation6 + $0x120] sm:$0xff]
        %v385 = vld [vmem:[#allocation6 + $0x128] sm:$0xff]
        %v386 = vld [vmem:[#allocation6 + $0x130] sm:$0xff]
        %v387 = vld [vmem:[#allocation6 + $0x138] sm:$0xff]
        %v388 = vld [vmem:[#allocation6 + $0x140] sm:$0xff]
        %v389 = vld [vmem:[#allocation6 + $0x148] sm:$0xff]
        %v390 = vld [vmem:[#allocation6 + $0x150] sm:$0xff]
        %v391 = vld [vmem:[#allocation6 + $0x158] sm:$0xff]
        %v392 = vld [vmem:[#allocation6 + $0x160] sm:$0xff]
        %v393 = vld [vmem:[#allocation6 + $0x168] sm:$0xff]
        %v394 = vld [vmem:[#allocation6 + $0x170] sm:$0xff]
        %v395 = vld [vmem:[#allocation6 + $0x178] sm:$0xff]
        %v396 = vld [vmem:[#allocation6 + $0x180] sm:$0xff]
        %v397 = vld [vmem:[#allocation6 + $0x188] sm:$0xff]
        %v398 = vld [vmem:[#allocation6 + $0x190] sm:$0xff]
        %v399 = vld [vmem:[#allocation6 + $0x198] sm:$0xff]
        %v400 = vld [vmem:[#allocation6 + $0x1a0] sm:$0xff]
        %v401 = vld [vmem:[#allocation6 + $0x1a8] sm:$0xff]
        %v402 = vld [vmem:[#allocation6 + $0x1b0] sm:$0xff]
        %v403 = vld [vmem:[#allocation6 + $0x1b8] sm:$0xff]
        %v404 = vld [vmem:[#allocation6 + $0x1c0] sm:$0xff]
        %v405 = vld [vmem:[#allocation6 + $0x1c8] sm:$0xff]
        %v406 = vld [vmem:[#allocation6 + $0x1d0] sm:$0xff]
        %v407 = vld [vmem:[#allocation6 + $0x1d8] sm:$0xff]
        %v408 = vld [vmem:[#allocation6 + $0x1e0] sm:$0xff]
        %v409 = vld [vmem:[#allocation6 + $0x1e8] sm:$0xff]
        %v410 = vld [vmem:[#allocation6 + $0x1f0] sm:$0xff]
        %v411 = vld [vmem:[#allocation6 + $0x1f8] sm:$0xff]
        %v412 = vld [vmem:[%s2] sm:$0x3]
        %v414 = vlaneseq
        %v415 = vshrl.u32 %v414, 7
        %v416 = vsub.s32 0, %v415
        %v417 = vrot.slane %v412, %v416
        %v418 = vlaneseq
        %v419 = vshrl.u32 %v418, 7
        %v420 = vsub.s32 1, %v419
        %v421 = vrot.slane %v412, %v420
        %v488 = vunpack.c.l.b16 %v348
        %v489 = vunpack.c.h.b16 %v348
        %v490 = vunpack.c.l.b16 %v349
        %v491 = vunpack.c.h.b16 %v349
        %v492 = vunpack.c.l.b16 %v350
        %v493 = vunpack.c.h.b16 %v350
        %v494 = vunpack.c.l.b16 %v351
        %v495 = vunpack.c.h.b16 %v351
        %v496 = vunpack.c.l.b16 %v352
        %v497 = vunpack.c.h.b16 %v352
        %v498 = vunpack.c.l.b16 %v353
        %v499 = vunpack.c.h.b16 %v353
        %v500 = vunpack.c.l.b16 %v354
        %v501 = vunpack.c.h.b16 %v354
        %v502 = vunpack.c.l.b16 %v355
        %v503 = vunpack.c.h.b16 %v355
        %v504 = vunpack.c.l.b16 %v356
        %v505 = vunpack.c.h.b16 %v356
        %v506 = vunpack.c.l.b16 %v357
        %v507 = vunpack.c.h.b16 %v357
        %v508 = vunpack.c.l.b16 %v358
        %v509 = vunpack.c.h.b16 %v358
        %v510 = vunpack.c.l.b16 %v359
        %v511 = vunpack.c.h.b16 %v359
        %v512 = vunpack.c.l.b16 %v360
        %v513 = vunpack.c.h.b16 %v360
        %v514 = vunpack.c.l.b16 %v361
        %v515 = vunpack.c.h.b16 %v361
        %v516 = vunpack.c.l.b16 %v362
        %v517 = vunpack.c.h.b16 %v362
        %v518 = vunpack.c.l.b16 %v363
        %v519 = vunpack.c.h.b16 %v363
        %v520 = vunpack.c.l.b16 %v364
        %v521 = vunpack.c.h.b16 %v364
        %v522 = vunpack.c.l.b16 %v365
        %v523 = vunpack.c.h.b16 %v365
        %v524 = vunpack.c.l.b16 %v366
        %v525 = vunpack.c.h.b16 %v366
        %v526 = vunpack.c.l.b16 %v367
        %v527 = vunpack.c.h.b16 %v367
        %v528 = vunpack.c.l.b16 %v368
        %v529 = vunpack.c.h.b16 %v368
        %v530 = vunpack.c.l.b16 %v369
        %v531 = vunpack.c.h.b16 %v369
        %v532 = vunpack.c.l.b16 %v370
        %v533 = vunpack.c.h.b16 %v370
        %v534 = vunpack.c.l.b16 %v371
        %v535 = vunpack.c.h.b16 %v371
        %v536 = vunpack.c.l.b16 %v372
        %v537 = vunpack.c.h.b16 %v372
        %v538 = vunpack.c.l.b16 %v373
        %v539 = vunpack.c.h.b16 %v373
        %v540 = vunpack.c.l.b16 %v374
        %v541 = vunpack.c.h.b16 %v374
        %v542 = vunpack.c.l.b16 %v375
        %v543 = vunpack.c.h.b16 %v375
        %v544 = vunpack.c.l.b16 %v376
        %v545 = vunpack.c.h.b16 %v376
        %v546 = vunpack.c.l.b16 %v377
        %v547 = vunpack.c.h.b16 %v377
        %v548 = vunpack.c.l.b16 %v378
        %v549 = vunpack.c.h.b16 %v378
        %v550 = vunpack.c.l.b16 %v379
        %v551 = vunpack.c.h.b16 %v379
        %v552 = vunpack.c.l.b16 %v380
        %v553 = vunpack.c.h.b16 %v380
        %v554 = vunpack.c.l.b16 %v381
        %v555 = vunpack.c.h.b16 %v381
        %v556 = vunpack.c.l.b16 %v382
        %v557 = vunpack.c.h.b16 %v382
        %v558 = vunpack.c.l.b16 %v383
        %v559 = vunpack.c.h.b16 %v383
        %v560 = vunpack.c.l.b16 %v384
        %v561 = vunpack.c.h.b16 %v384
        %v562 = vunpack.c.l.b16 %v385
        %v563 = vunpack.c.h.b16 %v385
        %v564 = vunpack.c.l.b16 %v386
        %v565 = vunpack.c.h.b16 %v386
        %v566 = vunpack.c.l.b16 %v387
        %v567 = vunpack.c.h.b16 %v387
        %v568 = vunpack.c.l.b16 %v388
        %v569 = vunpack.c.h.b16 %v388
        %v570 = vunpack.c.l.b16 %v389
        %v571 = vunpack.c.h.b16 %v389
        %v572 = vunpack.c.l.b16 %v390
        %v573 = vunpack.c.h.b16 %v390
        %v574 = vunpack.c.l.b16 %v391
        %v575 = vunpack.c.h.b16 %v391
        %v576 = vunpack.c.l.b16 %v392
        %v577 = vunpack.c.h.b16 %v392
        %v578 = vunpack.c.l.b16 %v393
        %v579 = vunpack.c.h.b16 %v393
        %v580 = vunpack.c.l.b16 %v394
        %v581 = vunpack.c.h.b16 %v394
        %v582 = vunpack.c.l.b16 %v395
        %v583 = vunpack.c.h.b16 %v395
        %v584 = vunpack.c.l.b16 %v396
        %v585 = vunpack.c.h.b16 %v396
        %v586 = vunpack.c.l.b16 %v397
        %v587 = vunpack.c.h.b16 %v397
        %v588 = vunpack.c.l.b16 %v398
        %v589 = vunpack.c.h.b16 %v398
        %v590 = vunpack.c.l.b16 %v399
        %v591 = vunpack.c.h.b16 %v399
        %v592 = vunpack.c.l.b16 %v400
        %v593 = vunpack.c.h.b16 %v400
        %v594 = vunpack.c.l.b16 %v401
        %v595 = vunpack.c.h.b16 %v401
        %v596 = vunpack.c.l.b16 %v402
        %v597 = vunpack.c.h.b16 %v402
        %v598 = vunpack.c.l.b16 %v403
        %v599 = vunpack.c.h.b16 %v403
        %v600 = vunpack.c.l.b16 %v404
        %v601 = vunpack.c.h.b16 %v404
        %v602 = vunpack.c.l.b16 %v405
        %v603 = vunpack.c.h.b16 %v405
        %v604 = vunpack.c.l.b16 %v406
        %v605 = vunpack.c.h.b16 %v406
        %v606 = vunpack.c.l.b16 %v407
        %v607 = vunpack.c.h.b16 %v407
        %v608 = vunpack.c.l.b16 %v408
        %v609 = vunpack.c.h.b16 %v408
        %v610 = vunpack.c.l.b16 %v409
        %v611 = vunpack.c.h.b16 %v409
        %v612 = vunpack.c.l.b16 %v410
        %v613 = vunpack.c.h.b16 %v410
        %v614 = vunpack.c.l.b16 %v411
        %v615 = vunpack.c.h.b16 %v411
        %v616 = vpack.c.b16 %v490, %v488
        %v617 = vpack.c.b16 %v491, %v489
        %v618 = vpack.c.b16 %v494, %v492
        %v619 = vpack.c.b16 %v495, %v493
        %v620 = vpack.c.b16 %v498, %v496
        %v621 = vpack.c.b16 %v499, %v497
        %v622 = vpack.c.b16 %v502, %v500
        %v623 = vpack.c.b16 %v503, %v501
        %v624 = vpack.c.b16 %v506, %v504
        %v625 = vpack.c.b16 %v507, %v505
        %v626 = vpack.c.b16 %v510, %v508
        %v627 = vpack.c.b16 %v511, %v509
        %v628 = vpack.c.b16 %v514, %v512
        %v629 = vpack.c.b16 %v515, %v513
        %v630 = vpack.c.b16 %v518, %v516
        %v631 = vpack.c.b16 %v519, %v517
        %v632 = vpack.c.b16 %v522, %v520
        %v633 = vpack.c.b16 %v523, %v521
        %v634 = vpack.c.b16 %v526, %v524
        %v635 = vpack.c.b16 %v527, %v525
        %v636 = vpack.c.b16 %v530, %v528
        %v637 = vpack.c.b16 %v531, %v529
        %v638 = vpack.c.b16 %v534, %v532
        %v639 = vpack.c.b16 %v535, %v533
        %v640 = vpack.c.b16 %v538, %v536
        %v641 = vpack.c.b16 %v539, %v537
        %v642 = vpack.c.b16 %v542, %v540
        %v643 = vpack.c.b16 %v543, %v541
        %v644 = vpack.c.b16 %v546, %v544
        %v645 = vpack.c.b16 %v547, %v545
        %v646 = vpack.c.b16 %v550, %v548
        %v647 = vpack.c.b16 %v551, %v549
        %v648 = vpack.c.b16 %v554, %v552
        %v649 = vpack.c.b16 %v555, %v553
        %v650 = vpack.c.b16 %v558, %v556
        %v651 = vpack.c.b16 %v559, %v557
        %v652 = vpack.c.b16 %v562, %v560
        %v653 = vpack.c.b16 %v563, %v561
        %v654 = vpack.c.b16 %v566, %v564
        %v655 = vpack.c.b16 %v567, %v565
        %v656 = vpack.c.b16 %v570, %v568
        %v657 = vpack.c.b16 %v571, %v569
        %v658 = vpack.c.b16 %v574, %v572
        %v659 = vpack.c.b16 %v575, %v573
        %v660 = vpack.c.b16 %v578, %v576
        %v661 = vpack.c.b16 %v579, %v577
        %v662 = vpack.c.b16 %v582, %v580
        %v663 = vpack.c.b16 %v583, %v581
        %v664 = vpack.c.b16 %v586, %v584
        %v665 = vpack.c.b16 %v587, %v585
        %v666 = vpack.c.b16 %v590, %v588
        %v667 = vpack.c.b16 %v591, %v589
        %v668 = vpack.c.b16 %v594, %v592
        %v669 = vpack.c.b16 %v595, %v593
        %v670 = vpack.c.b16 %v598, %v596
        %v671 = vpack.c.b16 %v599, %v597
        %v672 = vpack.c.b16 %v602, %v600
        %v673 = vpack.c.b16 %v603, %v601
        %v674 = vpack.c.b16 %v606, %v604
        %v675 = vpack.c.b16 %v607, %v605
        %v676 = vpack.c.b16 %v610, %v608
        %v677 = vpack.c.b16 %v611, %v609
        %v678 = vpack.c.b16 %v614, %v612
        %v679 = vpack.c.b16 %v615, %v613
        %744 = vmatprep.subr.bf16.mxu0 %v617
        %745 = vmatpush1.bf16.msra.mxu0 %v616
        %746 = vmatprep.subr.bf16.mxu0 %v619
        %747 = vmatpush1.bf16.msra.mxu0 %v618
        %748 = vmatprep.subr.bf16.mxu0 %v621
        %749 = vmatpush1.bf16.msra.mxu0 %v620
        %750 = vmatprep.subr.bf16.mxu0 %v623
        %751 = vmatpush1.bf16.msra.mxu0 %v622
        %752 = vmatprep.subr.bf16.mxu0 %v625
        %753 = vmatpush1.bf16.msra.mxu0 %v624
        %754 = vmatprep.subr.bf16.mxu0 %v627
        %755 = vmatpush1.bf16.msra.mxu0 %v626
        %756 = vmatprep.subr.bf16.mxu0 %v629
        %757 = vmatpush1.bf16.msra.mxu0 %v628
        %758 = vmatprep.subr.bf16.mxu0 %v631
        %759 = vmatpush1.bf16.msra.mxu0 %v630
        %760 = vmatprep.subr.bf16.mxu0 %v633
        %761 = vmatpush1.bf16.msra.mxu0 %v632
        %762 = vmatprep.subr.bf16.mxu0 %v635
        %763 = vmatpush1.bf16.msra.mxu0 %v634
        %764 = vmatprep.subr.bf16.mxu0 %v637
        %765 = vmatpush1.bf16.msra.mxu0 %v636
        %766 = vmatprep.subr.bf16.mxu0 %v639
        %767 = vmatpush1.bf16.msra.mxu0 %v638
        %768 = vmatprep.subr.bf16.mxu0 %v641
        %769 = vmatpush1.bf16.msra.mxu0 %v640
        %770 = vmatprep.subr.bf16.mxu0 %v643
        %771 = vmatpush1.bf16.msra.mxu0 %v642
        %772 = vmatprep.subr.bf16.mxu0 %v645
        %773 = vmatpush1.bf16.msra.mxu0 %v644
        %774 = vmatprep.subr.bf16.mxu0 %v647
        %775 = vmatpush1.bf16.msra.mxu0 %v646
        %776 = vmatprep.mubr.bf16.mxu0 %v345
        %777 = vmatmul.mubr.bf16.gmra.mrb[0].mxu0 %v344
        %v778 = vpop.f32.mrb[0].mxu0
        %v779 = vadd.f32 %v417, %v778
        %v780 = vpop.f32.mrb[0].mxu0
        %v781 = vadd.f32 %v421, %v780
        %v782 = vpop.f32.mrb[0].mxu0
        %v783 = vpop.f32.mrb[0].mxu0
        %784 = vdwg.mxu0
        %785 = vmatprep.subr.bf16.mxu0 %v649
        %786 = vmatpush1.bf16.msra.mxu0 %v648
        %787 = vmatprep.subr.bf16.mxu0 %v651
        %788 = vmatpush1.bf16.msra.mxu0 %v650
        %789 = vmatprep.subr.bf16.mxu0 %v653
        %790 = vmatpush1.bf16.msra.mxu0 %v652
        %791 = vmatprep.subr.bf16.mxu0 %v655
        %792 = vmatpush1.bf16.msra.mxu0 %v654
        %793 = vmatprep.subr.bf16.mxu0 %v657
        %794 = vmatpush1.bf16.msra.mxu0 %v656
        %795 = vmatprep.subr.bf16.mxu0 %v659
        %796 = vmatpush1.bf16.msra.mxu0 %v658
        %797 = vmatprep.subr.bf16.mxu0 %v661
        %798 = vmatpush1.bf16.msra.mxu0 %v660
        %799 = vmatprep.subr.bf16.mxu0 %v663
        %800 = vmatpush1.bf16.msra.mxu0 %v662
        %801 = vmatprep.subr.bf16.mxu0 %v665
        %802 = vmatpush1.bf16.msra.mxu0 %v664
        %803 = vmatprep.subr.bf16.mxu0 %v667
        %804 = vmatpush1.bf16.msra.mxu0 %v666
        %805 = vmatprep.subr.bf16.mxu0 %v669
        %806 = vmatpush1.bf16.msra.mxu0 %v668
        %807 = vmatprep.subr.bf16.mxu0 %v671
        %808 = vmatpush1.bf16.msra.mxu0 %v670
        %809 = vmatprep.subr.bf16.mxu0 %v673
        %810 = vmatpush1.bf16.msra.mxu0 %v672
        %811 = vmatprep.subr.bf16.mxu0 %v675
        %812 = vmatpush1.bf16.msra.mxu0 %v674
        %813 = vmatprep.subr.bf16.mxu0 %v677
        %814 = vmatpush1.bf16.msra.mxu0 %v676
        %815 = vmatprep.subr.bf16.mxu0 %v679
        %816 = vmatpush1.bf16.msra.mxu0 %v678
        %817 = vmatprep.mubr.bf16.mxu0 %v347
        %818 = vmatmul.mubr.bf16.gmra.mrb[0].mxu0 %v346
        %v819 = vpop.f32.mrb[0].mxu0
        %v820 = vadd.f32 %v779, %v819
        %v821 = vpop.f32.mrb[0].mxu0
        %v822 = vadd.f32 %v781, %v821
        %v823 = vpop.f32.mrb[0].mxu0
        %v824 = vpop.f32.mrb[0].mxu0
        %825 = vdwg.mxu0
        %vm826 = vcmp.gt.f32.partialorder %v820, 0.0
        %vm827 = vcmp.gt.f32.partialorder %v822, 0.0
        %v828 = vstv %s337
        %v829 = vmul.f32 %v828, %v820
        %v830 = vmul.f32 %v828, %v822
        %v831 = vsel %vm826, %v820, %v829
        %v832 = vsel %vm827, %v822, %v830
        %v833 = vpack.c.bf16 %v831, %v831
        %v834 = vpack.c.bf16 %v832, %v832
        %v835 = vld [vmem:[#allocation8] sm:$0xff]
        %v836 = vld [vmem:[#allocation8 + $0x8] sm:$0xff]
        %v837 = vld [vmem:[#allocation8 + $0x10] sm:$0xff]
        %v838 = vld [vmem:[#allocation8 + $0x18] sm:$0xff]
        %v839 = vld [vmem:[#allocation8 + $0x20] sm:$0xff]
        %v840 = vld [vmem:[#allocation8 + $0x28] sm:$0xff]
        %v841 = vld [vmem:[#allocation8 + $0x30] sm:$0xff]
        %v842 = vld [vmem:[#allocation8 + $0x38] sm:$0xff]
        %v843 = vld [vmem:[#allocation8 + $0x40] sm:$0xff]
        %v844 = vld [vmem:[#allocation8 + $0x48] sm:$0xff]
        %v845 = vld [vmem:[#allocation8 + $0x50] sm:$0xff]
        %v846 = vld [vmem:[#allocation8 + $0x58] sm:$0xff]
        %v847 = vld [vmem:[#allocation8 + $0x60] sm:$0xff]
        %v848 = vld [vmem:[#allocation8 + $0x68] sm:$0xff]
        %v849 = vld [vmem:[#allocation8 + $0x70] sm:$0xff]
        %v850 = vld [vmem:[#allocation8 + $0x78] sm:$0xff]
        %v851 = vld [vmem:[#allocation8 + $0x80] sm:$0xff]
        %v852 = vld [vmem:[#allocation8 + $0x88] sm:$0xff]
        %v853 = vld [vmem:[#allocation8 + $0x90] sm:$0xff]
        %v854 = vld [vmem:[#allocation8 + $0x98] sm:$0xff]
        %v855 = vld [vmem:[#allocation8 + $0xa0] sm:$0xff]
        %v856 = vld [vmem:[#allocation8 + $0xa8] sm:$0xff]
        %v857 = vld [vmem:[#allocation8 + $0xb0] sm:$0xff]
        %v858 = vld [vmem:[#allocation8 + $0xb8] sm:$0xff]
        %v859 = vld [vmem:[#allocation8 + $0xc0] sm:$0xff]
        %v860 = vld [vmem:[#allocation8 + $0xc8] sm:$0xff]
        %v861 = vld [vmem:[#allocation8 + $0xd0] sm:$0xff]
        %v862 = vld [vmem:[#allocation8 + $0xd8] sm:$0xff]
        %v863 = vld [vmem:[#allocation8 + $0xe0] sm:$0xff]
        %v864 = vld [vmem:[#allocation8 + $0xe8] sm:$0xff]
        %v865 = vld [vmem:[#allocation8 + $0xf0] sm:$0xff]
        %v866 = vld [vmem:[#allocation8 + $0xf8] sm:$0xff]
        %v867 = vld [vmem:[%s4] sm:$0x3]
        %v869 = vlaneseq
        %v870 = vshrl.u32 %v869, 7
        %v871 = vsub.s32 0, %v870
        %v872 = vrot.slane %v867, %v871
        %v873 = vlaneseq
        %v874 = vshrl.u32 %v873, 7
        %v875 = vsub.s32 1, %v874
        %v876 = vrot.slane %v867, %v875
        %v911 = vunpack.c.l.b16 %v835
        %v912 = vunpack.c.h.b16 %v835
        %v913 = vunpack.c.l.b16 %v836
        %v914 = vunpack.c.h.b16 %v836
        %v915 = vunpack.c.l.b16 %v837
        %v916 = vunpack.c.h.b16 %v837
        %v917 = vunpack.c.l.b16 %v838
        %v918 = vunpack.c.h.b16 %v838
        %v919 = vunpack.c.l.b16 %v839
        %v920 = vunpack.c.h.b16 %v839
        %v921 = vunpack.c.l.b16 %v840
        %v922 = vunpack.c.h.b16 %v840
        %v923 = vunpack.c.l.b16 %v841
        %v924 = vunpack.c.h.b16 %v841
        %v925 = vunpack.c.l.b16 %v842
        %v926 = vunpack.c.h.b16 %v842
        %v927 = vunpack.c.l.b16 %v843
        %v928 = vunpack.c.h.b16 %v843
        %v929 = vunpack.c.l.b16 %v844
        %v930 = vunpack.c.h.b16 %v844
        %v931 = vunpack.c.l.b16 %v845
        %v932 = vunpack.c.h.b16 %v845
        %v933 = vunpack.c.l.b16 %v846
        %v934 = vunpack.c.h.b16 %v846
        %v935 = vunpack.c.l.b16 %v847
        %v936 = vunpack.c.h.b16 %v847
        %v937 = vunpack.c.l.b16 %v848
        %v938 = vunpack.c.h.b16 %v848
        %v939 = vunpack.c.l.b16 %v849
        %v940 = vunpack.c.h.b16 %v849
        %v941 = vunpack.c.l.b16 %v850
        %v942 = vunpack.c.h.b16 %v850
        %v943 = vunpack.c.l.b16 %v851
        %v944 = vunpack.c.h.b16 %v851
        %v945 = vunpack.c.l.b16 %v852
        %v946 = vunpack.c.h.b16 %v852
        %v947 = vunpack.c.l.b16 %v853
        %v948 = vunpack.c.h.b16 %v853
        %v949 = vunpack.c.l.b16 %v854
        %v950 = vunpack.c.h.b16 %v854
        %v951 = vunpack.c.l.b16 %v855
        %v952 = vunpack.c.h.b16 %v855
        %v953 = vunpack.c.l.b16 %v856
        %v954 = vunpack.c.h.b16 %v856
        %v955 = vunpack.c.l.b16 %v857
        %v956 = vunpack.c.h.b16 %v857
        %v957 = vunpack.c.l.b16 %v858
        %v958 = vunpack.c.h.b16 %v858
        %v959 = vunpack.c.l.b16 %v859
        %v960 = vunpack.c.h.b16 %v859
        %v961 = vunpack.c.l.b16 %v860
        %v962 = vunpack.c.h.b16 %v860
        %v963 = vunpack.c.l.b16 %v861
        %v964 = vunpack.c.h.b16 %v861
        %v965 = vunpack.c.l.b16 %v862
        %v966 = vunpack.c.h.b16 %v862
        %v967 = vunpack.c.l.b16 %v863
        %v968 = vunpack.c.h.b16 %v863
        %v969 = vunpack.c.l.b16 %v864
        %v970 = vunpack.c.h.b16 %v864
        %v971 = vunpack.c.l.b16 %v865
        %v972 = vunpack.c.h.b16 %v865
        %v973 = vunpack.c.l.b16 %v866
        %v974 = vunpack.c.h.b16 %v866
        %v975 = vpack.c.b16 %v913, %v911
        %v976 = vpack.c.b16 %v914, %v912
        %v977 = vpack.c.b16 %v917, %v915
        %v978 = vpack.c.b16 %v918, %v916
        %v979 = vpack.c.b16 %v921, %v919
        %v980 = vpack.c.b16 %v922, %v920
        %v981 = vpack.c.b16 %v925, %v923
        %v982 = vpack.c.b16 %v926, %v924
        %v983 = vpack.c.b16 %v929, %v927
        %v984 = vpack.c.b16 %v930, %v928
        %v985 = vpack.c.b16 %v933, %v931
        %v986 = vpack.c.b16 %v934, %v932
        %v987 = vpack.c.b16 %v937, %v935
        %v988 = vpack.c.b16 %v938, %v936
        %v989 = vpack.c.b16 %v941, %v939
        %v990 = vpack.c.b16 %v942, %v940
        %v991 = vpack.c.b16 %v945, %v943
        %v992 = vpack.c.b16 %v946, %v944
        %v993 = vpack.c.b16 %v949, %v947
        %v994 = vpack.c.b16 %v950, %v948
        %v995 = vpack.c.b16 %v953, %v951
        %v996 = vpack.c.b16 %v954, %v952
        %v997 = vpack.c.b16 %v957, %v955
        %v998 = vpack.c.b16 %v958, %v956
        %v999 = vpack.c.b16 %v961, %v959
        %v1000 = vpack.c.b16 %v962, %v960
        %v1001 = vpack.c.b16 %v965, %v963
        %v1002 = vpack.c.b16 %v966, %v964
        %v1003 = vpack.c.b16 %v969, %v967
        %v1004 = vpack.c.b16 %v970, %v968
        %v1005 = vpack.c.b16 %v973, %v971
        %v1006 = vpack.c.b16 %v974, %v972
        %1039 = vmatprep.subr.bf16.mxu0 %v976
        %1040 = vmatpush1.bf16.msra.mxu0 %v975
        %1041 = vmatprep.subr.bf16.mxu0 %v978
        %1042 = vmatpush1.bf16.msra.mxu0 %v977
        %1043 = vmatprep.subr.bf16.mxu0 %v980
        %1044 = vmatpush1.bf16.msra.mxu0 %v979
        %1045 = vmatprep.subr.bf16.mxu0 %v982
        %1046 = vmatpush1.bf16.msra.mxu0 %v981
        %1047 = vmatprep.subr.bf16.mxu0 %v984
        %1048 = vmatpush1.bf16.msra.mxu0 %v983
        %1049 = vmatprep.subr.bf16.mxu0 %v986
        %1050 = vmatpush1.bf16.msra.mxu0 %v985
        %1051 = vmatprep.subr.bf16.mxu0 %v988
        %1052 = vmatpush1.bf16.msra.mxu0 %v987
        %1053 = vmatprep.subr.bf16.mxu0 %v990
        %1054 = vmatpush1.bf16.msra.mxu0 %v989
        %1055 = vmatprep.subr.bf16.mxu0 %v992
        %1056 = vmatpush1.bf16.msra.mxu0 %v991
        %1057 = vmatprep.subr.bf16.mxu0 %v994
        %1058 = vmatpush1.bf16.msra.mxu0 %v993
        %1059 = vmatprep.subr.bf16.mxu0 %v996
        %1060 = vmatpush1.bf16.msra.mxu0 %v995
        %1061 = vmatprep.subr.bf16.mxu0 %v998
        %1062 = vmatpush1.bf16.msra.mxu0 %v997
        %1063 = vmatprep.subr.bf16.mxu0 %v1000
        %1064 = vmatpush1.bf16.msra.mxu0 %v999
        %1065 = vmatprep.subr.bf16.mxu0 %v1002
        %1066 = vmatpush1.bf16.msra.mxu0 %v1001
        %1067 = vmatprep.subr.bf16.mxu0 %v1004
        %1068 = vmatpush1.bf16.msra.mxu0 %v1003
        %1069 = vmatprep.subr.bf16.mxu0 %v1006
        %1070 = vmatpush1.bf16.msra.mxu0 %v1005
        %1071 = vmatprep.mubr.bf16.mxu0 %v834
        %1072 = vmatmul.mubr.bf16.gmra.mrb[0].mxu0 %v833
        %v1073 = vpop.f32.mrb[0].mxu0
        %v1074 = vadd.f32 %v872, %v1073
        %v1075 = vpop.f32.mrb[0].mxu0
        %v1076 = vadd.f32 %v876, %v1075
        %v1077 = vpop.f32.mrb[0].mxu0
        %v1078 = vpop.f32.mrb[0].mxu0
        %1079 = vdwg.mxu0
        %vm1080 = vcmp.gt.f32.partialorder %v1074, 0.0
        %vm1081 = vcmp.gt.f32.partialorder %v1076, 0.0
        %v1082 = vstv %s338
        %v1083 = vmul.f32 %v1082, %v1074
        %v1084 = vmul.f32 %v1082, %v1076
        %v1085 = vsel %vm1080, %v1074, %v1083
        %v1086 = vsel %vm1081, %v1076, %v1084
        %v1087 = vld [vmem:[%s5] sm:$0x3]
        %v1089 = vlaneseq
        %v1090 = vshrl.u32 %v1089, 7
        %v1091 = vsub.s32 0, %v1090
        %v1092 = vrot.slane %v1087, %v1091
        %v1093 = vlaneseq
        %v1094 = vshrl.u32 %v1093, 7
        %v1095 = vsub.s32 1, %v1094
        %v1096 = vrot.slane %v1087, %v1095
        %v1099 = vmul.f32 %v1085, %v1092
        %v1100 = vmul.f32 %v1086, %v1096
        %v1101 = vadd.f32 %v1099, %v1100
        %1102 = vadd.xlane.f32.xlu0 %v1101
        %v1103 = vpop.xlane.xlu0 %1102
        %v1104 = vstv %s339
        %v1105 = vadd.f32 %v1103, %v1104
        %1106 = vxpose.xlu0.b32.start [1/16] %v1105, 128
        %1107 = vxpose.xlu0.b32.cont [2/16] 0.0, 128
        %1108 = vxpose.xlu0.b32.cont [3/16] 0.0, 128
        %1109 = vxpose.xlu0.b32.cont [4/16] 0.0, 128
        %1110 = vxpose.xlu0.b32.cont [5/16] 0.0, 128
        %1111 = vxpose.xlu0.b32.cont [6/16] 0.0, 128
        %1112 = vxpose.xlu0.b32.cont [7/16] 0.0, 128
        %1113 = vxpose.xlu0.b32.cont [8/16] 0.0, 128
        %1114 = vxpose.xlu0.b32.cont [9/16] 0.0, 128
        %1115 = vxpose.xlu0.b32.cont [10/16] 0.0, 128
        %1116 = vxpose.xlu0.b32.cont [11/16] 0.0, 128
        %1117 = vxpose.xlu0.b32.cont [12/16] 0.0, 128
        %1118 = vxpose.xlu0.b32.cont [13/16] 0.0, 128
        %1119 = vxpose.xlu0.b32.cont [14/16] 0.0, 128
        %1120 = vxpose.xlu0.b32.cont [15/16] 0.0, 128
        %1121 = vxpose.xlu0.b32.end [16/16] 0.0, 128
        %v1122 = vpop.trf.xlu0
        %v1123 = vpop.trf.xlu0
        %v1124 = vpop.trf.xlu0
        %v1125 = vpop.trf.xlu0
        %v1126 = vpop.trf.xlu0
        %v1127 = vpop.trf.xlu0
        %v1128 = vpop.trf.xlu0
        %v1129 = vpop.trf.xlu0
        %v1130 = vpop.trf.xlu0
        %v1131 = vpop.trf.xlu0
        %v1132 = vpop.trf.xlu0
        %v1133 = vpop.trf.xlu0
        %v1134 = vpop.trf.xlu0
        %v1135 = vpop.trf.xlu0
        %v1136 = vpop.trf.xlu0
        %v1137 = vpop.trf.xlu0
        %vm1138 = vcmask 57344
        %1139 = vst.msk [vmem:[%s336] sm:$0x1] %vm1138, %v1122
        %s1140 = sand.u32 %s186, 1
        %s1141 = scalar_lea.sflag [#allocation4], %s1140
        %s1142 = sand.u32 %s186, 1
        %s1143 = scalar_lea.vmem [#allocation10], %s1142
        // Predicated region
        $region65: #{tpu_custom_call.1} parent=47 // pred_check
          %p1144 = pneg %p196
        $region66: #{tpu_custom_call.1} parent=47 // pred_check_branch
          %1146 = sbr.rel (%p1144) target = $region68
        $region67: #{tpu_custom_call.1} parent=47 // pred_region
          %s1148 = ssub.s32 16, 16
          %1149 = vsyncadd %s1141, %s1148
          %s1150 = smul.addr %s26, 16
          %s1151 = scalar_lea.hbm %s7, %s1150
          %s1153 = sshll.u32 %s1143, 4
          %s1154 = int_to_ptr.vmem [resolvable:$true] %s1153
          %1156 = dma.vmem_to_hbm [thread:$0]  %s1154, 16, %s1151, %s1141
        $region68: #{tpu_custom_call.1} parent=47 // pred_fallthru
          _
      $region48: #{tpu_custom_call.1} parent=5 // pred_fallthru
        _
      %p1157 = scmp.le.s32.totalorder 2, %s21
      // Predicated region
      $region69: #{tpu_custom_call.1} parent=5 // pred_check
        %p1158 = pneg %p1157
      $region70: #{tpu_custom_call.1} parent=5 // pred_check_branch
        %1160 = sbr.rel (%p1158) target = $region72
      $region71: #{tpu_custom_call.1} parent=5 // pred_region
        %s1161 = ssub.s32 %s21, 2
        // Predicated region
        $region73: #{tpu_custom_call.1} parent=71 // pred_check
          %p1162 = pneg %p202
        $region74: #{tpu_custom_call.1} parent=71 // pred_check_branch
          %1164 = sbr.rel (%p1162) target = $region76
        $region75: #{tpu_custom_call.1} parent=71 // pred_region
          %s1165 = sand.u32 %s187, 1
          %s1166 = scalar_lea.sflag [#allocation4], %s1165
          %s1167 = sand.u32 %s187, 1
          %s1168 = scalar_lea.vmem [#allocation10], %s1167
          %1169 = dma.done %s1166, 16
        $region76: #{tpu_custom_call.1} parent=71 // pred_fallthru
          _
      $region72: #{tpu_custom_call.1} parent=5 // pred_fallthru
        _
    $region6: #{tpu_custom_call.1} parent=1 // loop_footer
      %s25 = sadd.s32 1, %s21
    $region7: #{tpu_custom_call.1} parent=1 // loop_footer_branch
      %20 = sbr.rel target = $region3
    $region8: #{tpu_custom_call.1} parent=1 // loop_exit
      _
    %1170 = vsyncpa [#allocation3], 1
    %s1171 = scalar_lea.sflag [#allocation3], 1
    %1172 = vsyncpa %s1171, 1
    %1173 = vsyncpa [#allocation7], 1
    %1174 = vsyncpa [#allocation4], 1
    %s1175 = scalar_lea.sflag [#allocation4], 1
    %1176 = vsyncpa %s1175, 1
    %1177 = vsyncpa [#allocation5], 1
    %s1178 = scalar_lea.sflag [#allocation5], 1
    %1179 = vsyncpa %s1178, 1

</llo_original>
